<compile_context>
chip_gen: v7x
topology: tpu7x:2x2x1
jax: 0.10.0
libtpu: 0.0.40
codegen_flags: <defaults>
</compile_context>

<pallas_src>
import jax
import jax.numpy as jnp
from jax.experimental import pallas as pl
from jax.experimental.pallas import tpu as pltpu


def _round_up(x, m):
    return (x + m - 1) // m * m


def _cdiv(a, b):
    return -(-a // b)


def _choose_tiles(bc, hw, min_itemsize):
    """Pick (row_tile, lane_tile) for the (BC, HW) view.

    Sublane granularity from the narrower dtype (8 f32 / 16 bf16 / 32 int8).  Row tile
    capped at 32 so accumulators + per-chunk temporaries stay in vregs.  Lane tile sized
    to stream ~0.5-2 MiB per grid step (amortizes the ~0.35us step overhead) while the
    double-buffered VMEM footprint stays well under every chip's scoped limit.
    """
    sub = max(8, 32 // max(1, min_itemsize))
    tr = min(_round_up(bc, sub), 32)
    hw128 = _round_up(hw, 128)
    max_tl = 8192 if tr <= 16 else 4096
    tl = min(hw128, max_tl)
    return tr, tl


def _make_kernel(tr, tl, bc, hw, n_inner, need_row_mask, need_col_mask):
    n_chunks = tl // 128

    def kernel(pred_ref, tgt_ref, bce_ref, inter_ref, union_ref):
        ki = pl.program_id(2)

        @pl.when(ki == 0)
        def _init():
            bce_ref[...] = jnp.zeros_like(bce_ref)
            inter_ref[...] = jnp.zeros_like(inter_ref)
            union_ref[...] = jnp.zeros_like(union_ref)

        # Accumulators live in vregs across the fused chunk loop (3 * tr/8 vregs).
        bce_acc = bce_ref[...]
        inter_acc = inter_ref[...]
        union_acc = union_ref[...]

        # Hoisted mask ingredients — only emitted when the shape is actually ragged.
        if need_row_mask:
            row_ids = (jax.lax.broadcasted_iota(jnp.int32, (tr, 128), 0)
                       + pl.program_id(0) * tr)
            row_valid = row_ids < bc
        if need_col_mask:
            col_base = (pl.program_id(1) * n_inner + ki) * tl
            lane_ids = jax.lax.broadcasted_iota(jnp.int32, (tr, 128), 1)

        for j in range(n_chunks):                      # static, lane-aligned 128-wide chunks
            sl = slice(j * 128, (j + 1) * 128)
            x = pred_ref[:, sl].astype(jnp.float32)    # logits chunk (tr, 128)
            t = tgt_ref[:, sl].astype(jnp.float32)     # targets chunk (tr, 128)

            valid = None
            if need_row_mask:
                valid = row_valid
            if need_col_mask:
                col_valid = (lane_ids + (col_base + j * 128)) < hw
                valid = col_valid if valid is None else (valid & col_valid)
            if valid is not None:
                # Masked elements behave like (logit=-100, target=0): ~0 contribution
                # to both the BCE sum and the dice sums (also scrubs OOB garbage/NaNs).
                x = jnp.where(valid, x, -100.0)
                t = jnp.where(valid, t, 0.0)

            # One exp per element serves both the BCE softplus term and sigmoid (EUP).
            e = jnp.exp(-jnp.abs(x))
            softplus = jnp.log1p(e)                    # log(1 + exp(-|x|))
            r = 1.0 / (1.0 + e)                        # exact f32 divide; on v7x (VALU-bound)
            # this could become pl.reciprocal(1.0 + e, approx=True) at ~1e-3 rel error.
            p = jnp.where(x >= 0.0, r, e * r)          # numerically stable sigmoid(x)

            # BCEWithLogits elementwise: max(x,0) - x*t + log(1 + exp(-|x|))
            bce_acc = bce_acc + (jnp.maximum(x, 0.0) - x * t + softplus)
            inter_acc = inter_acc + p * t
            union_acc = union_acc + (p + t)            # merged pred-sum + target-sum

        bce_ref[...] = bce_acc
        inter_ref[...] = inter_acc
        union_ref[...] = union_acc

    return kernel


@jax.jit
def bce_dice_loss(pred, target):
    """pred, target: (B, C, H, W), float dtype (f32/bf16). Returns scalar f32 loss."""
    smooth = 1e-6
    B, C, H, W = pred.shape
    bc, hw = B * C, H * W
    n_elem = bc * hw

    # Stream native dtypes (no wrapper-side cast or pad copies); cast per-chunk in-kernel.
    p2 = pred.reshape(bc, hw)
    t2 = target.reshape(bc, hw)

    min_itemsize = min(pred.dtype.itemsize, target.dtype.itemsize)
    tr, tl = _choose_tiles(bc, hw, min_itemsize)

    n_row_tiles = _cdiv(bc, tr)
    n_hw_tiles = _cdiv(hw, tl)
    # Megacore: if the row axis has a single program, expose parallelism by splitting the
    # HW tiles into an outer "parallel" axis (even splits only -> never a fully-OOB block).
    if n_row_tiles == 1 and n_hw_tiles >= 2 and n_hw_tiles % 2 == 0:
        n_outer = 2
    else:
        n_outer = 1
    n_inner = n_hw_tiles // n_outer

    bc_pad = n_row_tiles * tr
    need_row_mask = bc_pad != bc
    need_col_mask = n_hw_tiles * tl != hw

    kernel = _make_kernel(tr, tl, bc, hw, n_inner, need_row_mask, need_col_mask)

    in_spec = pl.BlockSpec((tr, tl), lambda i, ko, ki: (i, ko * n_inner + ki))
    # Per-(row tile, hw_outer) lane-dense partials, resident across the ki reduction axis.
    part_spec = pl.BlockSpec((tr, 128), lambda i, ko, ki: (i, ko))
    out_struct = jax.ShapeDtypeStruct((bc_pad, n_outer * 128), jnp.float32)

    bce_p, inter_p, union_p = pl.pallas_call(
        kernel,
        out_shape=(out_struct, out_struct, out_struct),
        grid=(n_row_tiles, n_outer, n_inner),
        in_specs=[in_spec, in_spec],
        out_specs=[part_spec, part_spec, part_spec],
        compiler_params=pltpu.CompilerParams(
            dimension_semantics=("parallel", "parallel", "arbitrary"),
            vmem_limit_bytes=32 * 1024 * 1024,
        ),
    )(p2, t2)

    # Tiny epilogue reductions in plain JAX (off the hot loop).
    bce_loss = jnp.sum(bce_p) / n_elem                 # masked rows/lanes contribute ~0
    inter = jnp.sum(inter_p[:bc], axis=1)              # (BC,)
    union = jnp.sum(union_p[:bc], axis=1)              # sum(p) + sum(t) per (batch, channel)
    dice = (2.0 * inter + smooth) / (union + smooth)
    dice_loss = 1.0 - jnp.mean(dice)
    return bce_loss + dice_loss


def _reference(pred, target):
    # Pure-JAX reference (matches the PyTorch module).
    x = pred.astype(jnp.float32)
    t = target.astype(jnp.float32)
    bce = jnp.mean(jnp.maximum(x, 0.0) - x * t + jnp.log1p(jnp.exp(-jnp.abs(x))))
    p = jax.nn.sigmoid(x)
    smooth = 1e-6
    inter = jnp.sum(p * t, axis=(2, 3))
    union = jnp.sum(p, axis=(2, 3)) + jnp.sum(t, axis=(2, 3))
    dice = 1.0 - jnp.mean((2.0 * inter + smooth) / (union + smooth))
    return bce + dice


if __name__ == "__main__":
    key = jax.random.PRNGKey(0)
    k1, k2 = jax.random.split(key)

    # Case 1: f32, shapes consistent with the module (B=2, C=4, 16x16) — fully divisible,
    # grid (1,1,1), no masking path.
    B, C, H, W = 2, 4, 16, 16
    pred = jax.random.normal(k1, (B, C, H, W), dtype=jnp.float32)               # logits
    target = jax.random.bernoulli(k2, 0.5, (B, C, H, W)).astype(jnp.float32)
    loss = jax.block_until_ready(bce_dice_loss(pred, target))
    ref = jax.block_until_ready(_reference(pred, target))
    assert jnp.allclose(loss, ref, atol=2e-4, rtol=2e-4), (loss, ref)

    # Case 2: bf16 native-dtype streaming, BC=6 < row tile -> in-kernel row masking.
    B2, C2, H2, W2 = 2, 3, 64, 64
    pred2 = jax.random.normal(k1, (B2, C2, H2, W2), dtype=jnp.float32).astype(jnp.bfloat16)
    target2 = jax.random.bernoulli(k2, 0.5, (B2, C2, H2, W2)).astype(jnp.bfloat16)
    loss2 = jax.block_until_ready(bce_dice_loss(pred2, target2))
    ref2 = jax.block_until_ready(_reference(pred2.astype(jnp.float32),
                                            target2.astype(jnp.float32)))
    assert jnp.allclose(loss2, ref2, atol=2e-4, rtol=2e-4), (loss2, ref2)

    # Case 3: f32, HW not a multiple of the lane tile -> in-kernel column masking,
    # hw_outer=2 (megacore split) and a multi-step ki reduction (grid (1,2,2)).
    B3, C3, H3, W3 = 2, 2, 160, 160
    pred3 = jax.random.normal(k1, (B3, C3, H3, W3), dtype=jnp.float32)
    target3 = jax.random.bernoulli(k2, 0.5, (B3, C3, H3, W3)).astype(jnp.float32)
    loss3 = jax.block_until_ready(bce_dice_loss(pred3, target3))
    ref3 = jax.block_until_ready(_reference(pred3, target3))
    assert jnp.allclose(loss3, ref3, atol=2e-4, rtol=2e-4), (loss3, ref3)

    print("KERNEL_OK")
</pallas_src>

<mosaic_0001>
module attributes {stable_mosaic.version = 11 : i64} {
  func.func @kernel(%arg0: i32, %arg1: i32, %arg2: i32, %arg3: memref<8x256xf32, #tpu.memory_space<vmem>>, %arg4: memref<8x256xf32, #tpu.memory_space<vmem>>, %arg5: memref<8x128xf32, #tpu.memory_space<vmem>>, %arg6: memref<8x128xf32, #tpu.memory_space<vmem>>, %arg7: memref<8x128xf32, #tpu.memory_space<vmem>>) attributes {dimension_semantics = [#tpu.dimension_semantics<parallel>, #tpu.dimension_semantics<parallel>, #tpu.dimension_semantics<arbitrary>], iteration_bounds = array<i64: 1, 1, 1>, scalar_prefetch = 0 : i64, scratch_operands = 0 : i64, tpu.core_type = #tpu.core_type<tc>, window_params = [{transform_indices = @transform_0, window_bounds = array<i64: 8, 256>}, {transform_indices = @transform_1, window_bounds = array<i64: 8, 256>}, {transform_indices = @transform_2, window_bounds = array<i64: 8, 128>}, {transform_indices = @transform_3, window_bounds = array<i64: 8, 128>}, {transform_indices = @transform_4, window_bounds = array<i64: 8, 128>}]} {
    %c0_i32 = arith.constant 0 : i32
    %0 = arith.cmpi eq, %arg2, %c0_i32 : i32
    %1 = arith.extui %0 : i1 to i32
    %c0_i32_0 = arith.constant 0 : i32
    %2 = arith.cmpi ne, %1, %c0_i32_0 : i32
    scf.if %2 {
      %cst_28 = arith.constant 0.000000e+00 : f32
      %59 = vector.broadcast %cst_28 : f32 to vector<8x128xf32>
      %c0_29 = arith.constant 0 : index
      %c0_30 = arith.constant 0 : index
      %60 = vector.load %arg5[%c0_29, %c0_30] : memref<8x128xf32, #tpu.memory_space<vmem>>, vector<8x128xf32>
      tpu.vector_store %arg5[%c0_29, %c0_30], %59 {strides = array<i32>} : memref<8x128xf32, #tpu.memory_space<vmem>>, vector<8x128xf32>,
      %cst_31 = arith.constant 0.000000e+00 : f32
      %61 = vector.broadcast %cst_31 : f32 to vector<8x128xf32>
      %c0_32 = arith.constant 0 : index
      %c0_33 = arith.constant 0 : index
      %62 = vector.load %arg6[%c0_32, %c0_33] : memref<8x128xf32, #tpu.memory_space<vmem>>, vector<8x128xf32>
      tpu.vector_store %arg6[%c0_32, %c0_33], %61 {strides = array<i32>} : memref<8x128xf32, #tpu.memory_space<vmem>>, vector<8x128xf32>,
      %cst_34 = arith.constant 0.000000e+00 : f32
      %63 = vector.broadcast %cst_34 : f32 to vector<8x128xf32>
      %c0_35 = arith.constant 0 : index
      %c0_36 = arith.constant 0 : index
      %64 = vector.load %arg7[%c0_35, %c0_36] : memref<8x128xf32, #tpu.memory_space<vmem>>, vector<8x128xf32>
      tpu.vector_store %arg7[%c0_35, %c0_36], %63 {strides = array<i32>} : memref<8x128xf32, #tpu.memory_space<vmem>>, vector<8x128xf32>,
    } else {
    }
    %c0 = arith.constant 0 : index
    %c0_1 = arith.constant 0 : index
    %3 = vector.load %arg5[%c0, %c0_1] : memref<8x128xf32, #tpu.memory_space<vmem>>, vector<8x128xf32>
    %c0_2 = arith.constant 0 : index
    %c0_3 = arith.constant 0 : index
    %4 = vector.load %arg6[%c0_2, %c0_3] : memref<8x128xf32, #tpu.memory_space<vmem>>, vector<8x128xf32>
    %c0_4 = arith.constant 0 : index
    %c0_5 = arith.constant 0 : index
    %5 = vector.load %arg7[%c0_4, %c0_5] : memref<8x128xf32, #tpu.memory_space<vmem>>, vector<8x128xf32>
    %c0_6 = arith.constant 0 : index
    %c0_7 = arith.constant 0 : index
    %6 = vector.load %arg3[%c0_6, %c0_7] : memref<8x256xf32, #tpu.memory_space<vmem>>, vector<8x128xf32>
    %c0_8 = arith.constant 0 : index
    %c0_9 = arith.constant 0 : index
    %7 = vector.load %arg4[%c0_8, %c0_9] : memref<8x256xf32, #tpu.memory_space<vmem>>, vector<8x128xf32>
    %8 = math.absf %6 : vector<8x128xf32>
    %cst = arith.constant 0.000000e+00 : f32
    %9 = vector.broadcast %cst : f32 to vector<8x128xf32>
    %10 = arith.subf %9, %8 : vector<8x128xf32>
    %11 = math.exp %10 : vector<8x128xf32>
    %12 = math.log1p %11 : vector<8x128xf32>
    %cst_10 = arith.constant 1.000000e+00 : f32
    %13 = vector.broadcast %cst_10 : f32 to vector<8x128xf32>
    %14 = arith.addf %13, %11 : vector<8x128xf32>
    %cst_11 = arith.constant 1.000000e+00 : f32
    %15 = vector.broadcast %cst_11 : f32 to vector<8x128xf32>
    %16 = arith.divf %15, %14 : vector<8x128xf32>
    %cst_12 = arith.constant 0.000000e+00 : f32
    %17 = vector.broadcast %cst_12 : f32 to vector<8x128xf32>
    %18 = arith.cmpf oge, %6, %17 : vector<8x128xf32>
    %19 = arith.mulf %11, %16 : vector<8x128xf32>
    %20 = arith.select %18, %16, %19 : vector<8x128xi1>, vector<8x128xf32>
    %cst_13 = arith.constant 0.000000e+00 : f32
    %21 = vector.broadcast %cst_13 : f32 to vector<8x128xf32>
    %22 = arith.maximumf %6, %21 : vector<8x128xf32>
    %23 = arith.mulf %6, %7 : vector<8x128xf32>
    %24 = arith.subf %22, %23 : vector<8x128xf32>
    %25 = arith.addf %24, %12 : vector<8x128xf32>
    %26 = arith.addf %3, %25 : vector<8x128xf32>
    %27 = arith.mulf %20, %7 : vector<8x128xf32>
    %28 = arith.addf %4, %27 : vector<8x128xf32>
    %29 = arith.addf %20, %7 : vector<8x128xf32>
    %30 = arith.addf %5, %29 : vector<8x128xf32>
    %c0_14 = arith.constant 0 : index
    %c128 = arith.constant 128 : index
    %31 = vector.load %arg3[%c0_14, %c128] : memref<8x256xf32, #tpu.memory_space<vmem>>, vector<8x128xf32>
    %c0_15 = arith.constant 0 : index
    %c128_16 = arith.constant 128 : index
    %32 = vector.load %arg4[%c0_15, %c128_16] : memref<8x256xf32, #tpu.memory_space<vmem>>, vector<8x128xf32>
    %33 = math.absf %31 : vector<8x128xf32>
    %cst_17 = arith.constant 0.000000e+00 : f32
    %34 = vector.broadcast %cst_17 : f32 to vector<8x128xf32>
    %35 = arith.subf %34, %33 : vector<8x128xf32>
    %36 = math.exp %35 : vector<8x128xf32>
    %37 = math.log1p %36 : vector<8x128xf32>
    %cst_18 = arith.constant 1.000000e+00 : f32
    %38 = vector.broadcast %cst_18 : f32 to vector<8x128xf32>
    %39 = arith.addf %38, %36 : vector<8x128xf32>
    %cst_19 = arith.constant 1.000000e+00 : f32
    %40 = vector.broadcast %cst_19 : f32 to vector<8x128xf32>
    %41 = arith.divf %40, %39 : vector<8x128xf32>
    %cst_20 = arith.constant 0.000000e+00 : f32
    %42 = vector.broadcast %cst_20 : f32 to vector<8x128xf32>
    %43 = arith.cmpf oge, %31, %42 : vector<8x128xf32>
    %44 = arith.mulf %36, %41 : vector<8x128xf32>
    %45 = arith.select %43, %41, %44 : vector<8x128xi1>, vector<8x128xf32>
    %cst_21 = arith.constant 0.000000e+00 : f32
    %46 = vector.broadcast %cst_21 : f32 to vector<8x128xf32>
    %47 = arith.maximumf %31, %46 : vector<8x128xf32>
    %48 = arith.mulf %31, %32 : vector<8x128xf32>
    %49 = arith.subf %47, %48 : vector<8x128xf32>
    %50 = arith.addf %49, %37 : vector<8x128xf32>
    %51 = arith.addf %26, %50 : vector<8x128xf32>
    %52 = arith.mulf %45, %32 : vector<8x128xf32>
    %53 = arith.addf %28, %52 : vector<8x128xf32>
    %54 = arith.addf %45, %32 : vector<8x128xf32>
    %55 = arith.addf %30, %54 : vector<8x128xf32>
    %c0_22 = arith.constant 0 : index
    %c0_23 = arith.constant 0 : index
    %56 = vector.load %arg5[%c0_22, %c0_23] : memref<8x128xf32, #tpu.memory_space<vmem>>, vector<8x128xf32>
    tpu.vector_store %arg5[%c0_22, %c0_23], %51 {strides = array<i32>} : memref<8x128xf32, #tpu.memory_space<vmem>>, vector<8x128xf32>,
    %c0_24 = arith.constant 0 : index
    %c0_25 = arith.constant 0 : index
    %57 = vector.load %arg6[%c0_24, %c0_25] : memref<8x128xf32, #tpu.memory_space<vmem>>, vector<8x128xf32>
    tpu.vector_store %arg6[%c0_24, %c0_25], %53 {strides = array<i32>} : memref<8x128xf32, #tpu.memory_space<vmem>>, vector<8x128xf32>,
    %c0_26 = arith.constant 0 : index
    %c0_27 = arith.constant 0 : index
    %58 = vector.load %arg7[%c0_26, %c0_27] : memref<8x128xf32, #tpu.memory_space<vmem>>, vector<8x128xf32>
    tpu.vector_store %arg7[%c0_26, %c0_27], %55 {strides = array<i32>} : memref<8x128xf32, #tpu.memory_space<vmem>>, vector<8x128xf32>,
    return
  }
  func.func @transform_0(%arg0: i32, %arg1: i32, %arg2: i32) -> (i32, i32) {
    %c1_i32 = arith.constant 1 : i32
    %0 = arith.muli %arg1, %c1_i32 : i32
    %1 = arith.addi %0, %arg2 : i32
    %c0_i32 = arith.constant 0 : i32
    return %arg0, %1 : i32, i32
  }
  func.func @transform_1(%arg0: i32, %arg1: i32, %arg2: i32) -> (i32, i32) {
    %c1_i32 = arith.constant 1 : i32
    %0 = arith.muli %arg1, %c1_i32 : i32
    %1 = arith.addi %0, %arg2 : i32
    %c0_i32 = arith.constant 0 : i32
    return %arg0, %1 : i32, i32
  }
  func.func @transform_2(%arg0: i32, %arg1: i32, %arg2: i32) -> (i32, i32) {
    %c0_i32 = arith.constant 0 : i32
    return %arg0, %arg1 : i32, i32
  }
  func.func @transform_3(%arg0: i32, %arg1: i32, %arg2: i32) -> (i32, i32) {
    %c0_i32 = arith.constant 0 : i32
    return %arg0, %arg1 : i32, i32
  }
  func.func @transform_4(%arg0: i32, %arg1: i32, %arg2: i32) -> (i32, i32) {
    %c0_i32 = arith.constant 0 : i32
    return %arg0, %arg1 : i32, i32
  }
}

</mosaic_0001>

<llo_original>
// kernel: bce_dice_loss.1
$region0: #{bce_dice_loss.1}
  #allocation0 [shape = 'u32[]', space=smem, size = 0x4, offset = 0x4, fixed_abs, tag = 'smem constant byte address 0x4 - core index']
  #allocation1 [shape = 'u32[144,128]{1,0:T(1,128)}', space=vmem, size = 0x12000, scoped, tag = 'internal scratch']
  %s0 = inlined_call_operand.vmem [shape: f32[8,256], index: 0, kind: input, shape index: {}]
  %s1 = inlined_call_operand.vmem [shape: f32[8,256], index: 1, kind: input, shape index: {}]
  %s2 = inlined_call_operand.vmem [shape: f32[8,128], index: 2, kind: output, shape index: {0}]
  %s3 = inlined_call_operand.vmem [shape: f32[8,128], index: 3, kind: output, shape index: {1}]
  %s4 = inlined_call_operand.vmem [shape: f32[8,128], index: 4, kind: output, shape index: {2}]
  %5 = xla_tuple %s2, %s3, %s4
  %s6 = sld [smem:[#allocation0]]
  $region38: #{bce_dice_loss.1} parent=0
    _
  %s8 = ssub.s32 1, %s6
  %s9 = scalar_select 0, %s8, %s6
  // Predicated region
  $region2: #{bce_dice_loss.1} parent=0 // pred_check
    _
  $region3: #{bce_dice_loss.1} parent=0 // pred_check_branch
    %11 = sbr.rel (0) target = $region5
  $region4: #{bce_dice_loss.1} parent=0 // pred_region
    %s12 = sadd.s32 0, 0
    %s13 = smul.u32 2, %s12
    %p14 = scmp.lt.s32.totalorder %s13, 1
    %s15 = scalar_select %p14, %s13, 1
    %s16 = smul.addr %s15, 8
    %s17 = scalar_lea.vmem %s0, %s16
    %s18 = sadd.s32 0, 0
    %s19 = smul.u32 2, %s18
  $region5: #{bce_dice_loss.1} parent=0 // pred_fallthru
    _
  // Predicated region
  $region6: #{bce_dice_loss.1} parent=0 // pred_check
    _
  $region7: #{bce_dice_loss.1} parent=0 // pred_check_branch
    %21 = sbr.rel (0) target = $region9
  $region8: #{bce_dice_loss.1} parent=0 // pred_region
    %s22 = sadd.s32 0, 0
    %s23 = smul.u32 2, %s22
    %p24 = scmp.lt.s32.totalorder %s23, 1
    %s25 = scalar_select %p24, %s23, 1
    %s26 = smul.addr %s25, 8
    %s27 = scalar_lea.vmem %s1, %s26
    %s28 = sadd.s32 0, 0
    %s29 = smul.u32 2, %s28
  $region9: #{bce_dice_loss.1} parent=0 // pred_fallthru
    _
  %s30 = sadd.s32 0, 0
  %s31 = smul.u32 2, %s30
  %p32 = scmp.lt.s32.totalorder %s31, 1
  %s33 = scalar_select %p32, %s31, 1
  %s34 = smul.addr %s33, 8
  %s35 = scalar_lea.vmem %s0, %s34
  %s36 = sadd.s32 0, 0
  %s37 = smul.u32 2, %s36
  %p38 = scmp.lt.s32.totalorder %s37, 1
  %s39 = scalar_select %p38, %s37, 1
  %s40 = smul.addr %s39, 8
  %s41 = scalar_lea.vmem %s1, %s40
  %s42 = sadd.s32 0, 0
  %s43 = smul.u32 2, %s42
  %p44 = scmp.lt.s32.totalorder %s43, 1
  %s45 = scalar_select %p44, %s43, 1
  %s46 = smul.addr %s45, 8
  %s47 = scalar_lea.vmem %s0, %s46
  %s48 = sadd.s32 0, 0
  %s49 = smul.u32 2, %s48
  %s50 = sadd.s32 0, 0
  %s51 = smul.u32 2, %s50
  %p52 = scmp.lt.s32.totalorder %s51, 1
  %s53 = scalar_select %p52, %s51, 1
  %s54 = smul.addr %s53, 8
  %s55 = scalar_lea.vmem %s1, %s54
  %s56 = sadd.s32 0, 0
  %s57 = smul.u32 2, %s56
  %p58 = scmp.eq.s32.totalorder 0, 0
  // Predicated region
  $region10: #{bce_dice_loss.1} parent=0 // pred_check
    %p59 = pneg %p58
  $region11: #{bce_dice_loss.1} parent=0 // pred_check_branch
    %61 = sbr.rel (%p59) target = $region13
  $region12: #{bce_dice_loss.1} parent=0 // pred_region
    %62 = vst [vmem:[%s2] sm:$0xff] 0.0
    %63 = vst [vmem:[%s3] sm:$0xff] 0.0
    %64 = vst [vmem:[%s4] sm:$0xff] 0.0
  $region13: #{bce_dice_loss.1} parent=0 // pred_fallthru
    _
  %v65 = vld [vmem:[%s2] sm:$0xff]
  %v66 = vld [vmem:[%s3] sm:$0xff]
  %v67 = vld [vmem:[%s4] sm:$0xff]
  %v68 = vld [vmem:[%s47] sm:$0xff]
  %v69 = vld [vmem:[%s55] sm:$0xff]
  %v70 = vand.u32 2147483647, %v68
  %v71 = vsub.f32 0.0, %v70
  %v72 = vmul.f32 %v71, 1.442695
  %v73 = vpow.pop %v72
  %v74 = vadd.f32 %v73, 1.0
  %v75 = vlog2.pop %v74
  %v76 = vmul.f32 %v75, 0.6931472
  %v77 = vmul.f32 -0.5, %v73
  %v78 = vadd.f32 %v77, 1.0
  %v79 = vmul.f32 %v78, %v73
  %v80 = vand.u32 2147483647, %v73
  %vm81 = vcmp.lt.f32.partialorder %v80, 0.0004427343
  %v82 = vsel %vm81, %v79, %v76
  %v83 = vadd.f32 %v73, 1.0
  %v84 = vrcp.pop %v83
  %v85 = vmul.f32 1.0, %v84
  %vm86 = vcmp.ge.f32.partialorder %v68, 0.0
  %v87 = vmul.f32 %v73, %v85
  %v88 = vsel %vm86, %v85, %v87
  %v89 = vmax.f32 %v68, 0.0
  %v90 = vmul.f32 %v68, %v69
  %v91 = vsub.f32 %v89, %v90
  %v92 = vadd.f32 %v91, %v82
  %v93 = vadd.f32 %v65, %v92
  %v94 = vmul.f32 %v88, %v69
  %v95 = vadd.f32 %v66, %v94
  %v96 = vadd.f32 %v88, %v69
  %v97 = vadd.f32 %v67, %v96
  %v98 = vld [vmem:[%s47 + $0x8] sm:$0xff]
  %v99 = vld [vmem:[%s55 + $0x8] sm:$0xff]
  %v100 = vand.u32 2147483647, %v98
  %v101 = vsub.f32 0.0, %v100
  %v102 = vmul.f32 %v101, 1.442695
  %v103 = vpow.pop %v102
  %v104 = vadd.f32 %v103, 1.0
  %v105 = vlog2.pop %v104
  %v106 = vmul.f32 %v105, 0.6931472
  %v107 = vmul.f32 -0.5, %v103
  %v108 = vadd.f32 %v107, 1.0
  %v109 = vmul.f32 %v108, %v103
  %v110 = vand.u32 2147483647, %v103
  %vm111 = vcmp.lt.f32.partialorder %v110, 0.0004427343
  %v112 = vsel %vm111, %v109, %v106
  %v113 = vadd.f32 %v103, 1.0
  %v114 = vrcp.pop %v113
  %v115 = vmul.f32 1.0, %v114
  %vm116 = vcmp.ge.f32.partialorder %v98, 0.0
  %v117 = vmul.f32 %v103, %v115
  %v118 = vsel %vm116, %v115, %v117
  %v119 = vmax.f32 %v98, 0.0
  %v120 = vmul.f32 %v98, %v99
  %v121 = vsub.f32 %v119, %v120
  %v122 = vadd.f32 %v121, %v112
  %v123 = vadd.f32 %v93, %v122
  %v124 = vmul.f32 %v118, %v99
  %v125 = vadd.f32 %v95, %v124
  %v126 = vadd.f32 %v118, %v99
  %v127 = vadd.f32 %v97, %v126
  %128 = vst [vmem:[%s2] sm:$0xff] %v123
  %129 = vst [vmem:[%s3] sm:$0xff] %v125
  %130 = vst [vmem:[%s4] sm:$0xff] %v127
  // Predicated region
  $region14: #{bce_dice_loss.1} parent=0 // pred_check
    _
  $region15: #{bce_dice_loss.1} parent=0 // pred_check_branch
    %132 = sbr.rel (0) target = $region17
  $region16: #{bce_dice_loss.1} parent=0 // pred_region
    _
  $region17: #{bce_dice_loss.1} parent=0 // pred_fallthru
    _
  // Predicated region
  $region18: #{bce_dice_loss.1} parent=0 // pred_check
    _
  $region19: #{bce_dice_loss.1} parent=0 // pred_check_branch
    %134 = sbr.rel (0) target = $region21
  $region20: #{bce_dice_loss.1} parent=0 // pred_region
    _
  $region21: #{bce_dice_loss.1} parent=0 // pred_fallthru
    _
  // Predicated region
  $region22: #{bce_dice_loss.1} parent=0 // pred_check
    _
  $region23: #{bce_dice_loss.1} parent=0 // pred_check_branch
    %136 = sbr.rel (0) target = $region25
  $region24: #{bce_dice_loss.1} parent=0 // pred_region
    _
  $region25: #{bce_dice_loss.1} parent=0 // pred_fallthru
    _
  // Predicated region
  $region26: #{bce_dice_loss.1} parent=0 // pred_check
    _
  $region27: #{bce_dice_loss.1} parent=0 // pred_check_branch
    %138 = sbr.rel (0) target = $region29
  $region28: #{bce_dice_loss.1} parent=0 // pred_region
    _
  $region29: #{bce_dice_loss.1} parent=0 // pred_fallthru
    _
  // Predicated region
  $region30: #{bce_dice_loss.1} parent=0 // pred_check
    _
  $region31: #{bce_dice_loss.1} parent=0 // pred_check_branch
    %140 = sbr.rel (0) target = $region33
  $region32: #{bce_dice_loss.1} parent=0 // pred_region
    _
  $region33: #{bce_dice_loss.1} parent=0 // pred_fallthru
    _
  // Predicated region
  $region34: #{bce_dice_loss.1} parent=0 // pred_check
    _
  $region35: #{bce_dice_loss.1} parent=0 // pred_check_branch
    %142 = sbr.rel (0) target = $region37
  $region36: #{bce_dice_loss.1} parent=0 // pred_region
    _
  $region37: #{bce_dice_loss.1} parent=0 // pred_fallthru
    _

</llo_original>
